<compile_context>
chip_gen: v5e
topology: v5e:2x2
jax: 0.10.0
libtpu: 0.0.40
codegen_flags: <defaults>
</compile_context>

<pallas_src>
import math

import jax
import jax.numpy as jnp
from jax.experimental import pallas as pl
from jax.experimental.pallas import tpu as pltpu


def spatial_decoder_kernel(xa_ref, h_ref, adj_ref, w_zg_ref, nb_ref,
                           w_lo_h_ref, alpha_ref, w_ro_a_ref, w_ro_h_ref,
                           b_ro_ref, out_ro_ref, out_act_ref):
    s, _, n = adj_ref.shape
    tb, _, dm = h_ref.shape                       # h block is (tb, n, d_model)
    d_out = out_ro_ref.shape[-1]
    d_in = xa_ref.shape[-1] // tb

    h2 = h_ref[...].reshape(tb * n, dm)           # (tb*n, dm), trivial reshape

    # --- graph propagation first (linearity): one wide matmul per support,
    #     whole batch block merged into the MXU N / lane dimension. ---
    xa = xa_ref[...]                              # (n, tb*d_in), node-major
    ax = [jnp.dot(adj_ref[k], xa, preferred_element_type=jnp.float32)
          for k in range(s)]                      # s x (n, tb*d_in)

    # Pivot node-major (n, batch*chan) -> batch-major rows (tb*n, s*chan) so
    # the folded 1x1-conv contraction sees channels on the K/lane axis.
    # Static lane slices + one sublane concat; the tb*s tiny matmuls and their
    # repeated MXU weight pushes from the previous version are gone.
    rows = []
    for bi in range(tb):
        cols = [a[:, bi * d_in:(bi + 1) * d_in] for a in ax]
        rows.append(cols[0] if s == 1 else jnp.concatenate(cols, axis=-1))
    axs = rows[0] if tb == 1 else jnp.concatenate(rows, axis=0)  # (tb*n, s*d_in)

    # lin_in, graph_conv.mlp and the graph half of lin_out: one folded matmul.
    # nb carries every bias of that chain (node-dependent, folded in wrapper).
    lo = (jnp.dot(axs, w_zg_ref[...], preferred_element_type=jnp.float32)
          + jnp.dot(h2, w_lo_h_ref[...], preferred_element_type=jnp.float32))
    lo = (lo.reshape(tb, n, dm) + nb_ref[...]).reshape(tb * n, dm)

    alpha = alpha_ref[0]                          # scalar from SMEM
    act = jnp.where(lo > 0, lo, alpha * lo)       # PReLU (single shared alpha)

    # read_out with split weights (no [act, h] lane concat).
    ro = (jnp.dot(act, w_ro_a_ref[...], preferred_element_type=jnp.float32)
          + jnp.dot(h2, w_ro_h_ref[...], preferred_element_type=jnp.float32)
          + b_ro_ref[...])

    out_act_ref[...] = act.reshape(tb, n, dm)
    out_ro_ref[...] = ro.reshape(tb, n, d_out)


def _batch_block(b, n, d_in, target_rows=512):
    """Batch elements per grid step.

    Single grid step by default (v5e/v6e have one TensorCore, so extra steps
    only add per-step overhead).  For large batches, split into blocks whose
    node-major input keeps its lane dim a multiple of 128 (Pallas (8,128)
    tiling rule on the last block dim) and which divide the batch exactly.
    """
    if b * n <= 2 * target_rows:
        return b
    t0 = 128 // math.gcd(d_in, 128)
    cands = [t for t in range(t0, b, t0) if b % t == 0 and t * n >= 128]
    if not cands:
        return b
    return min(cands, key=lambda t: abs(t * n - target_rows))


def spatial_decoder(x, m, h, u, adj, params):
    """x: (b, d_x, n)  m: (b, d_m, 1)  h: (b, d_model, n_h)  u: (b, d_u, n) or None
       adj: (support_len, n, n) stacked supports (order == 1).
       Returns (read_out, cat_out) in PyTorch (b, c, n) layout."""
    b, _, n = x.shape
    m = jnp.broadcast_to(m, (b, m.shape[1], n))            # m.expand(-1, -1, n)
    if h.shape[2] != n:
        h = h[:, :, :n]
    feats = [x, m, h] if u is None else [x, m, u, h]

    # TODO(synk): order > 1 (compute_support_orderK), attention_block=True
    # (SpatialAttention) and the batch-repeat branch are not exercised here.

    # Build the graph-conv input directly in node-major (n, b, c) order (no
    # intermediate NCW concat materialized + re-transposed in HBM) and flatten
    # to (n, b*d_in) so the kernel's adjacency matmul needs no in-kernel
    # relayout of its RHS.
    x_nbc = jnp.concatenate([jnp.transpose(f, (2, 0, 1)) for f in feats],
                            axis=-1)                       # (n, b, d_in)
    d_in = x_nbc.shape[-1]
    xa = x_nbc.reshape(n, b * d_in)
    h_bnc = jnp.transpose(h, (0, 2, 1))                    # (b, n, d_model)

    dm = h_bnc.shape[-1]
    s = adj.shape[0]
    d_out = params['w_ro'].shape[-1]
    tb = _batch_block(b, n, d_in)
    grid = (b // tb,)

    # ---- wrapper-side weight folding (pure XLA, done once under jit) ----
    w_gc_k = params['w_gc'].reshape(s, dm, dm)             # rows k*dm:(k+1)*dm
    w_lo_g, w_lo_h = params['w_lo'][:dm], params['w_lo'][dm:]
    w_ro_a, w_ro_h = params['w_ro'][:dm], params['w_ro'][dm:]
    # Graph branch of lin_out folded all the way into lin_in / graph_conv.
    w_fold = jnp.einsum('io,sop,pq->siq',
                        params['w_in'], w_gc_k, w_lo_g)    # (s, d_in, dm)
    b_fold = jnp.einsum('xo,sop,pq->sxq',
                        params['b_in'], w_gc_k, w_lo_g)    # (s, 1, dm)
    w_zg = w_fold.reshape(s * d_in, dm)                    # matches axs columns
    # Node-dependent bias: sum_k (A_k @ 1) bk'  +  b_gc @ w_lo_g  +  b_lo.
    row_sums = jnp.sum(adj, axis=2)                        # (s, n)
    nb = jnp.einsum('sv,sxq->vq', row_sums, b_fold)        # (n, dm)
    nb = (nb + params['b_gc'] @ w_lo_g + params['b_lo'])[None]   # (1, n, dm)
    alpha = params['alpha'].reshape((1,)).astype(jnp.float32)
    b_ro = params['b_ro']
    # TODO(synk): for v6e/v7x production shapes, cast xa/h and the folded
    # weights to bf16 here (keep preferred_element_type=f32 in the kernel) for
    # MXU throughput; kept fp32 so the demo meets the fp32 tolerance check.

    def const(shape):
        return pl.BlockSpec(shape, lambda *_: (0,) * len(shape))

    flops = 2 * b * n * (s * n * d_in + s * d_in * dm + dm * dm + 2 * dm * d_out)
    bytes_accessed = 4 * (n * b * d_in + 2 * b * n * dm + s * n * n
                          + s * d_in * dm + n * dm + dm * dm
                          + 2 * dm * d_out + d_out + 1 + b * n * d_out)
    block_bytes = 4 * (n * tb * d_in + 2 * tb * n * dm + s * n * n
                       + s * d_in * dm + n * dm + dm * dm
                       + 2 * dm * d_out + d_out + tb * n * d_out)
    vmem_limit = int(min(max(6 * block_bytes, 32 * 2 ** 20), 64 * 2 ** 20))

    # TODO(synk): for production n >= 128, (a) keep nodes on the 128-lane axis
    # end-to-end inside the kernel (NCW layout) so both outputs store
    # lane-dense, and (b) on v7x (64 MiB VMEM) mark the constant adj/weight
    # specs pipeline_mode=pl.Buffered(1) so blocks whose index never moves are
    # not double-buffered.

    out_ro, out_act = pl.pallas_call(
        spatial_decoder_kernel,
        grid=grid,
        in_specs=[
            pl.BlockSpec((n, tb * d_in), lambda i: (0, i)),        # node-major x
            pl.BlockSpec((tb, n, dm), lambda i: (i, 0, 0)),        # h
            const((s, n, n)),                                      # adjacency
            const((s * d_in, dm)),                                 # folded weight
            const((1, n, dm)),                                     # folded bias
            const((dm, dm)),                                       # w_lo_h
            pl.BlockSpec(memory_space=pltpu.MemorySpace.SMEM),     # alpha scalar
            const((dm, d_out)),                                    # w_ro_a
            const((dm, d_out)),                                    # w_ro_h
            const((1, d_out)),                                     # b_ro
        ],
        out_specs=[
            pl.BlockSpec((tb, n, d_out), lambda i: (i, 0, 0)),
            pl.BlockSpec((tb, n, dm), lambda i: (i, 0, 0)),
        ],
        out_shape=[
            jax.ShapeDtypeStruct((b, n, d_out), jnp.float32),
            jax.ShapeDtypeStruct((b, n, dm), jnp.float32),
        ],
        compiler_params=pltpu.CompilerParams(
            dimension_semantics=("parallel",),
            vmem_limit_bytes=vmem_limit),
        cost_estimate=pl.CostEstimate(flops=flops, transcendentals=0,
                                      bytes_accessed=bytes_accessed),
    )(xa, h_bnc, adj, w_zg, nb, w_lo_h, alpha, w_ro_a, w_ro_h, b_ro)

    # Back to PyTorch NCW layout; the [act, h] concat happens here on HBM
    # arrays (h already exists — the kernel never re-stores it).
    ro_ncw = jnp.transpose(out_ro, (0, 2, 1))              # (b, d_out, n)
    act_ncw = jnp.transpose(out_act, (0, 2, 1))            # (b, d_model, n)
    cat_ncw = jnp.concatenate([act_ncw, h], axis=1)        # (b, 2*d_model, n)
    return ro_ncw, cat_ncw


def spatial_decoder_ref(x, m, h, u, adj, params):
    """Pure-JAX reference mirroring the PyTorch forward (no weight folding)."""
    b, _, n = x.shape
    m = jnp.broadcast_to(m, (b, m.shape[1], n))
    h = h[:, :, :n]
    feats = [x, m, h] if u is None else [x, m, u, h]
    x_bnc = jnp.transpose(jnp.concatenate(feats, axis=1), (0, 2, 1))
    h_bnc = jnp.transpose(h, (0, 2, 1))
    z = x_bnc @ params['w_in'] + params['b_in']
    props = [jnp.einsum('vw,bwd->bvd', adj[k], z) for k in range(adj.shape[0])]
    gc = jnp.concatenate(props, axis=-1) @ params['w_gc'] + params['b_gc']
    lo = jnp.concatenate([gc, h_bnc], axis=-1) @ params['w_lo'] + params['b_lo']
    a = params['alpha'].reshape(())
    act = jnp.where(lo > 0, lo, a * lo)
    cat = jnp.concatenate([act, h_bnc], axis=-1)
    ro = cat @ params['w_ro'] + params['b_ro']
    return jnp.transpose(ro, (0, 2, 1)), jnp.transpose(cat, (0, 2, 1))


if __name__ == "__main__":
    key = jax.random.PRNGKey(0)
    keys = jax.random.split(key, 16)

    # small shapes consistent with the module's forward
    b, n = 4, 16
    d_x, d_m, d_u = 1, 1, 2
    d_model = 32          # hidden size of h (lin_out expects 2*d_model)
    d_out = 1
    support_len = 2
    d_in = d_x + d_m + d_u + d_model

    x = jax.random.normal(keys[0], (b, d_x, n), jnp.float32)
    m = jax.random.bernoulli(keys[1], 0.5, (b, d_m, 1)).astype(jnp.float32)
    u = jax.random.normal(keys[2], (b, d_u, n), jnp.float32)
    h = jax.random.normal(keys[3], (b, d_model, n), jnp.float32)
    adj = jax.random.uniform(keys[4], (support_len, n, n), jnp.float32)

    # deterministic synthetic parameters (weights stored transposed: (c_in, c_out))
    s = 0.1
    params = dict(
        w_in=s * jax.random.normal(keys[5], (d_in, d_model), jnp.float32),
        b_in=s * jax.random.normal(keys[6], (1, d_model), jnp.float32),
        w_gc=s * jax.random.normal(keys[7], (support_len * d_model, d_model), jnp.float32),
        b_gc=s * jax.random.normal(keys[8], (1, d_model), jnp.float32),
        w_lo=s * jax.random.normal(keys[9], (2 * d_model, d_model), jnp.float32),
        b_lo=s * jax.random.normal(keys[10], (1, d_model), jnp.float32),
        alpha=jnp.full((1,), 0.25, jnp.float32),        # PReLU default init
        w_ro=s * jax.random.normal(keys[11], (2 * d_model, d_out), jnp.float32),
        b_ro=s * jax.random.normal(keys[12], (1, d_out), jnp.float32),
    )

    out_ro, out_cat = spatial_decoder(x, m, h, u, adj, params)
    jax.block_until_ready((out_ro, out_cat))

    assert out_ro.shape == (b, d_out, n)
    assert out_cat.shape == (b, 2 * d_model, n)
    assert jnp.all(jnp.isfinite(out_ro)) and jnp.all(jnp.isfinite(out_cat))

    # correctness vs plain-JAX reference (folds only reassociate fp32 matmuls)
    ref_ro, ref_cat = spatial_decoder_ref(x, m, h, u, adj, params)
    assert jnp.allclose(out_ro, ref_ro, rtol=1e-4, atol=1e-4)
    assert jnp.allclose(out_cat, ref_cat, rtol=1e-4, atol=1e-4)

    print("KERNEL_OK")
</pallas_src>

<mosaic_0001>
module attributes {stable_mosaic.version = 11 : i64} {
  func.func @spatial_decoder_kernel(%arg0: i32, %arg1: memref<16x144xf32, #tpu.memory_space<vmem>>, %arg2: memref<4x16x32xf32, #tpu.memory_space<vmem>>, %arg3: memref<2x16x16xf32, #tpu.memory_space<vmem>>, %arg4: memref<72x32xf32, #tpu.memory_space<vmem>>, %arg5: memref<1x16x32xf32, #tpu.memory_space<vmem>>, %arg6: memref<32x32xf32, #tpu.memory_space<vmem>>, %arg7: memref<1xf32, #tpu.memory_space<smem>>, %arg8: memref<32x1xf32, #tpu.memory_space<vmem>>, %arg9: memref<32x1xf32, #tpu.memory_space<vmem>>, %arg10: memref<1x1xf32, #tpu.memory_space<vmem>>, %arg11: memref<4x16x1xf32, #tpu.memory_space<vmem>>, %arg12: memref<4x16x32xf32, #tpu.memory_space<vmem>>) attributes {dimension_semantics = [#tpu.dimension_semantics<parallel>], iteration_bounds = array<i64: 1>, scalar_prefetch = 0 : i64, scratch_operands = 0 : i64, tpu.core_type = #tpu.core_type<tc>, window_params = [{transform_indices = @transform_0, window_bounds = array<i64: 16, 144>}, {transform_indices = @transform_1, window_bounds = array<i64: 4, 16, 32>}, {pipeline_mode = #tpu.pipeline_mode<synchronous>, transform_indices = @transform_2, window_bounds = array<i64: 2, 16, 16>}, {pipeline_mode = #tpu.pipeline_mode<synchronous>, transform_indices = @transform_3, window_bounds = array<i64: 72, 32>}, {pipeline_mode = #tpu.pipeline_mode<synchronous>, transform_indices = @transform_4, window_bounds = array<i64: 1, 16, 32>}, {pipeline_mode = #tpu.pipeline_mode<synchronous>, transform_indices = @transform_5, window_bounds = array<i64: 32, 32>}, {transform_indices = @transform_6, window_bounds = array<i64: 1>}, {pipeline_mode = #tpu.pipeline_mode<synchronous>, transform_indices = @transform_7, window_bounds = array<i64: 32, 1>}, {pipeline_mode = #tpu.pipeline_mode<synchronous>, transform_indices = @transform_8, window_bounds = array<i64: 32, 1>}, {pipeline_mode = #tpu.pipeline_mode<synchronous>, transform_indices = @transform_9, window_bounds = array<i64: 1, 1>}, {transform_indices = @transform_10, window_bounds = array<i64: 4, 16, 1>}, {transform_indices = @transform_11, window_bounds = array<i64: 4, 16, 32>}]} {
    %c0 = arith.constant 0 : index
    %c0_0 = arith.constant 0 : index
    %c0_1 = arith.constant 0 : index
    %0 = vector.load %arg2[%c0, %c0_0, %c0_1] : memref<4x16x32xf32, #tpu.memory_space<vmem>>, vector<4x16x32xf32>
    %1 = vector.shape_cast %0 : vector<4x16x32xf32> to vector<64x32xf32>
    %c0_2 = arith.constant 0 : index
    %c0_3 = arith.constant 0 : index
    %2 = vector.load %arg1[%c0_2, %c0_3] : memref<16x144xf32, #tpu.memory_space<vmem>>, vector<16x144xf32>
    %c0_4 = arith.constant 0 : index
    %c0_5 = arith.constant 0 : index
    %c0_6 = arith.constant 0 : index
    %3 = vector.load %arg3[%c0_4, %c0_5, %c0_6] : memref<2x16x16xf32, #tpu.memory_space<vmem>>, vector<1x16x16xf32>
    %4 = vector.shape_cast %3 : vector<1x16x16xf32> to vector<16x16xf32>
    %cst = arith.constant dense<0.000000e+00> : vector<16x144xf32>
    %5 = tpu.matmul %4, %2, %cst {dimension_numbers = #tpu.dot_dimension_numbers<[1], [0], [0], [1], [0, 0, 1, 1], [], []>} : vector<16x16xf32>, vector<16x144xf32>, vector<16x144xf32> -> vector<16x144xf32>
    %c1 = arith.constant 1 : index
    %c0_7 = arith.constant 0 : index
    %c0_8 = arith.constant 0 : index
    %6 = vector.load %arg3[%c1, %c0_7, %c0_8] : memref<2x16x16xf32, #tpu.memory_space<vmem>>, vector<1x16x16xf32>
    %7 = vector.shape_cast %6 : vector<1x16x16xf32> to vector<16x16xf32>
    %cst_9 = arith.constant dense<0.000000e+00> : vector<16x144xf32>
    %8 = tpu.matmul %7, %2, %cst_9 {dimension_numbers = #tpu.dot_dimension_numbers<[1], [0], [0], [1], [0, 0, 1, 1], [], []>} : vector<16x16xf32>, vector<16x144xf32>, vector<16x144xf32> -> vector<16x144xf32>
    %9 = vector.extract_strided_slice %5 {offsets = [0, 0], sizes = [16, 36], strides = [1, 1]} : vector<16x144xf32> to vector<16x36xf32>
    %10 = vector.extract_strided_slice %8 {offsets = [0, 0], sizes = [16, 36], strides = [1, 1]} : vector<16x144xf32> to vector<16x36xf32>
    %11 = tpu.concatenate %9, %10 in 1 : vector<16x36xf32>, vector<16x36xf32> -> vector<16x72xf32>
    %12 = vector.extract_strided_slice %5 {offsets = [0, 36], sizes = [16, 36], strides = [1, 1]} : vector<16x144xf32> to vector<16x36xf32>
    %13 = vector.extract_strided_slice %8 {offsets = [0, 36], sizes = [16, 36], strides = [1, 1]} : vector<16x144xf32> to vector<16x36xf32>
    %14 = tpu.concatenate %12, %13 in 1 : vector<16x36xf32>, vector<16x36xf32> -> vector<16x72xf32>
    %15 = vector.extract_strided_slice %5 {offsets = [0, 72], sizes = [16, 36], strides = [1, 1]} : vector<16x144xf32> to vector<16x36xf32>
    %16 = vector.extract_strided_slice %8 {offsets = [0, 72], sizes = [16, 36], strides = [1, 1]} : vector<16x144xf32> to vector<16x36xf32>
    %17 = tpu.concatenate %15, %16 in 1 : vector<16x36xf32>, vector<16x36xf32> -> vector<16x72xf32>
    %18 = vector.extract_strided_slice %5 {offsets = [0, 108], sizes = [16, 36], strides = [1, 1]} : vector<16x144xf32> to vector<16x36xf32>
    %19 = vector.extract_strided_slice %8 {offsets = [0, 108], sizes = [16, 36], strides = [1, 1]} : vector<16x144xf32> to vector<16x36xf32>
    %20 = tpu.concatenate %18, %19 in 1 : vector<16x36xf32>, vector<16x36xf32> -> vector<16x72xf32>
    %21 = tpu.concatenate %11, %14, %17, %20 in 0 : vector<16x72xf32>, vector<16x72xf32>, vector<16x72xf32>, vector<16x72xf32> -> vector<64x72xf32>
    %c0_10 = arith.constant 0 : index
    %c0_11 = arith.constant 0 : index
    %22 = vector.load %arg4[%c0_10, %c0_11] : memref<72x32xf32, #tpu.memory_space<vmem>>, vector<72x32xf32>
    %cst_12 = arith.constant dense<0.000000e+00> : vector<64x32xf32>
    %23 = tpu.matmul %21, %22, %cst_12 {dimension_numbers = #tpu.dot_dimension_numbers<[1], [0], [0], [1], [0, 0, 1, 1], [], []>} : vector<64x72xf32>, vector<72x32xf32>, vector<64x32xf32> -> vector<64x32xf32>
    %c0_13 = arith.constant 0 : index
    %c0_14 = arith.constant 0 : index
    %24 = vector.load %arg6[%c0_13, %c0_14] : memref<32x32xf32, #tpu.memory_space<vmem>>, vector<32x32xf32>
    %cst_15 = arith.constant dense<0.000000e+00> : vector<64x32xf32>
    %25 = tpu.matmul %1, %24, %cst_15 {dimension_numbers = #tpu.dot_dimension_numbers<[1], [0], [0], [1], [0, 0, 1, 1], [], []>} : vector<64x32xf32>, vector<32x32xf32>, vector<64x32xf32> -> vector<64x32xf32>
    %26 = arith.addf %23, %25 : vector<64x32xf32>
    %27 = vector.shape_cast %26 : vector<64x32xf32> to vector<4x16x32xf32>
    %c0_16 = arith.constant 0 : index
    %c0_17 = arith.constant 0 : index
    %c0_18 = arith.constant 0 : index
    %28 = vector.load %arg5[%c0_16, %c0_17, %c0_18] : memref<1x16x32xf32, #tpu.memory_space<vmem>>, vector<1x16x32xf32>
    %29 = vector.broadcast %28 : vector<1x16x32xf32> to vector<4x16x32xf32>
    %30 = arith.addf %27, %29 : vector<4x16x32xf32>
    %31 = vector.shape_cast %30 : vector<4x16x32xf32> to vector<64x32xf32>
    %c0_19 = arith.constant 0 : index
    %32 = memref.load %arg7[%c0_19] : memref<1xf32, #tpu.memory_space<smem>>
    %cst_20 = arith.constant 0.000000e+00 : f32
    %33 = vector.broadcast %cst_20 : f32 to vector<64x32xf32>
    %34 = arith.cmpf ogt, %31, %33 : vector<64x32xf32>
    %35 = vector.broadcast %32 : f32 to vector<64x32xf32>
    %36 = arith.mulf %35, %31 : vector<64x32xf32>
    %37 = arith.select %34, %31, %36 : vector<64x32xi1>, vector<64x32xf32>
    %c0_21 = arith.constant 0 : index
    %c0_22 = arith.constant 0 : index
    %38 = vector.load %arg8[%c0_21, %c0_22] : memref<32x1xf32, #tpu.memory_space<vmem>>, vector<32x1xf32>
    %cst_23 = arith.constant dense<0.000000e+00> : vector<64x1xf32>
    %39 = tpu.matmul %37, %38, %cst_23 {dimension_numbers = #tpu.dot_dimension_numbers<[1], [0], [0], [1], [0, 0, 1, 1], [], []>} : vector<64x32xf32>, vector<32x1xf32>, vector<64x1xf32> -> vector<64x1xf32>
    %c0_24 = arith.constant 0 : index
    %c0_25 = arith.constant 0 : index
    %40 = vector.load %arg9[%c0_24, %c0_25] : memref<32x1xf32, #tpu.memory_space<vmem>>, vector<32x1xf32>
    %cst_26 = arith.constant dense<0.000000e+00> : vector<64x1xf32>
    %41 = tpu.matmul %1, %40, %cst_26 {dimension_numbers = #tpu.dot_dimension_numbers<[1], [0], [0], [1], [0, 0, 1, 1], [], []>} : vector<64x32xf32>, vector<32x1xf32>, vector<64x1xf32> -> vector<64x1xf32>
    %42 = arith.addf %39, %41 : vector<64x1xf32>
    %c0_27 = arith.constant 0 : index
    %c0_28 = arith.constant 0 : index
    %43 = vector.load %arg10[%c0_27, %c0_28] : memref<1x1xf32, #tpu.memory_space<vmem>>, vector<1x1xf32>
    %44 = vector.broadcast %43 : vector<1x1xf32> to vector<64x1xf32>
    %45 = arith.addf %42, %44 : vector<64x1xf32>
    %46 = vector.shape_cast %37 : vector<64x32xf32> to vector<4x16x32xf32>
    %c0_29 = arith.constant 0 : index
    %c0_30 = arith.constant 0 : index
    %c0_31 = arith.constant 0 : index
    %47 = vector.load %arg12[%c0_29, %c0_30, %c0_31] : memref<4x16x32xf32, #tpu.memory_space<vmem>>, vector<4x16x32xf32>
    tpu.vector_store %arg12[%c0_29, %c0_30, %c0_31], %46 {strides = array<i32>} : memref<4x16x32xf32, #tpu.memory_space<vmem>>, vector<4x16x32xf32>,
    %48 = vector.shape_cast %45 : vector<64x1xf32> to vector<4x16x1xf32>
    %c0_32 = arith.constant 0 : index
    %c0_33 = arith.constant 0 : index
    %c0_34 = arith.constant 0 : index
    %49 = vector.load %arg11[%c0_32, %c0_33, %c0_34] : memref<4x16x1xf32, #tpu.memory_space<vmem>>, vector<4x16x1xf32>
    tpu.vector_store %arg11[%c0_32, %c0_33, %c0_34], %48 {strides = array<i32>} : memref<4x16x1xf32, #tpu.memory_space<vmem>>, vector<4x16x1xf32>,
    return
  }
  func.func @transform_0(%arg0: i32) -> (i32, i32) {
    %c0_i32 = arith.constant 0 : i32
    %c0_i32_0 = arith.constant 0 : i32
    return %c0_i32, %arg0 : i32, i32
  }
  func.func @transform_1(%arg0: i32) -> (i32, i32, i32) {
    %c0_i32 = arith.constant 0 : i32
    %c0_i32_0 = arith.constant 0 : i32
    %c0_i32_1 = arith.constant 0 : i32
    return %arg0, %c0_i32, %c0_i32_0 : i32, i32, i32
  }
  func.func @transform_2(%arg0: i32) -> (i32, i32, i32) {
    %c0_i32 = arith.constant 0 : i32
    %c0_i32_0 = arith.constant 0 : i32
    %c0_i32_1 = arith.constant 0 : i32
    %c0_i32_2 = arith.constant 0 : i32
    return %c0_i32, %c0_i32_0, %c0_i32_1 : i32, i32, i32
  }
  func.func @transform_3(%arg0: i32) -> (i32, i32) {
    %c0_i32 = arith.constant 0 : i32
    %c0_i32_0 = arith.constant 0 : i32
    %c0_i32_1 = arith.constant 0 : i32
    return %c0_i32, %c0_i32_0 : i32, i32
  }
  func.func @transform_4(%arg0: i32) -> (i32, i32, i32) {
    %c0_i32 = arith.constant 0 : i32
    %c0_i32_0 = arith.constant 0 : i32
    %c0_i32_1 = arith.constant 0 : i32
    %c0_i32_2 = arith.constant 0 : i32
    return %c0_i32, %c0_i32_0, %c0_i32_1 : i32, i32, i32
  }
  func.func @transform_5(%arg0: i32) -> (i32, i32) {
    %c0_i32 = arith.constant 0 : i32
    %c0_i32_0 = arith.constant 0 : i32
    %c0_i32_1 = arith.constant 0 : i32
    return %c0_i32, %c0_i32_0 : i32, i32
  }
  func.func @transform_6(%arg0: i32) -> i32 {
    %c0_i32 = arith.constant 0 : i32
    %c0_i32_0 = arith.constant 0 : i32
    return %c0_i32 : i32
  }
  func.func @transform_7(%arg0: i32) -> (i32, i32) {
    %c0_i32 = arith.constant 0 : i32
    %c0_i32_0 = arith.constant 0 : i32
    %c0_i32_1 = arith.constant 0 : i32
    return %c0_i32, %c0_i32_0 : i32, i32
  }
  func.func @transform_8(%arg0: i32) -> (i32, i32) {
    %c0_i32 = arith.constant 0 : i32
    %c0_i32_0 = arith.constant 0 : i32
    %c0_i32_1 = arith.constant 0 : i32
    return %c0_i32, %c0_i32_0 : i32, i32
  }
  func.func @transform_9(%arg0: i32) -> (i32, i32) {
    %c0_i32 = arith.constant 0 : i32
    %c0_i32_0 = arith.constant 0 : i32
    %c0_i32_1 = arith.constant 0 : i32
    return %c0_i32, %c0_i32_0 : i32, i32
  }
  func.func @transform_10(%arg0: i32) -> (i32, i32, i32) {
    %c0_i32 = arith.constant 0 : i32
    %c0_i32_0 = arith.constant 0 : i32
    %c0_i32_1 = arith.constant 0 : i32
    return %arg0, %c0_i32, %c0_i32_0 : i32, i32, i32
  }
  func.func @transform_11(%arg0: i32) -> (i32, i32, i32) {
    %c0_i32 = arith.constant 0 : i32
    %c0_i32_0 = arith.constant 0 : i32
    %c0_i32_1 = arith.constant 0 : i32
    return %arg0, %c0_i32, %c0_i32_0 : i32, i32, i32
  }
}

</mosaic_0001>

<llo_original>
// kernel: tpu_custom_call.1
$region0: #{tpu_custom_call.1}
  #allocation0 [shape = 'u32[]', space=smem, size = 0x4, offset = 0x4, fixed_abs, tag = 'smem constant byte address 0x4 - core index']
  #allocation1 [shape = 'u32[72,128]{1,0:T(1,128)}', space=vmem, size = 0x9000, scoped, tag = 'internal scratch']
  #allocation2 [shape = 'f32[1]{0:T(128)S(6)}', space=smem, size = 0x200, scoped, tag = 'scoped memory for tpu_custom_call.1']
  #allocation3 [shape = 'f32[1,1]{1,0:T(1,128)S(1)}', space=vmem, size = 0x200, scoped, tag = 'scoped memory for tpu_custom_call.1']
  %s0 = inlined_call_operand.vmem [shape: f32[16,144], index: 0, kind: input, shape index: {}]
  %s1 = inlined_call_operand.vmem [shape: f32[4,16,32], index: 1, kind: input, shape index: {}]
  %s2 = inlined_call_operand.vmem [shape: f32[2,16,16], index: 2, kind: input, shape index: {}]
  %s3 = inlined_call_operand.vmem [shape: f32[72,32], index: 3, kind: input, shape index: {}]
  %s4 = inlined_call_operand.vmem [shape: f32[1,16,32], index: 4, kind: input, shape index: {}]
  %s5 = inlined_call_operand.vmem [shape: f32[32,32], index: 5, kind: input, shape index: {}]
  %s6 = inlined_call_operand.<no memory space> [shape: f32[1], index: 6, kind: input, shape index: {}]
  %s7 = inlined_call_operand.vmem [shape: f32[32,1], index: 7, kind: input, shape index: {}]
  %s8 = inlined_call_operand.vmem [shape: f32[32,1], index: 8, kind: input, shape index: {}]
  %s9 = inlined_call_operand.<no memory space> [shape: f32[1,1], index: 9, kind: input, shape index: {}]
  %s10 = inlined_call_operand.vmem [shape: f32[4,16,1], index: 10, kind: output, shape index: {0}]
  %s11 = inlined_call_operand.hbm [shape: f32[4,16,32], index: 11, kind: output, shape index: {1}]
  %12 = xla_tuple %s10, %s11
  %s13 = sld [smem:[#allocation0]]
  $region58: #{tpu_custom_call.1} parent=0
    _
  %s15 = ssub.s32 1, %s13
  %s16 = scalar_select 0, %s15, %s13
  %17 = sst [smem:[#allocation2]] %s6
  %v18 = vstv %s9
  %19 = vst [vmem:[#allocation3] sm:$0x1] %v18
  $region1: #{tpu_custom_call.1} parent=0
    #allocation4 [shape = 'u8[32768]{0}', space=vmem, size = 0x8000, scoped, tag = 'output window, operand 1, single buffered']
    #allocation5 [shape = 's32[1]{0}', space=sflag, size = 0x4, scoped, tag = 'scoped memory for tpu_custom_call.1']
    %20 = vsyncpa [#allocation5], 0
    // Predicated region
    $region2: #{tpu_custom_call.1} parent=1 // pred_check
      _
    $region3: #{tpu_custom_call.1} parent=1 // pred_check_branch
      %22 = sbr.rel (0) target = $region5
    $region4: #{tpu_custom_call.1} parent=1 // pred_region
      _
    $region5: #{tpu_custom_call.1} parent=1 // pred_fallthru
      _
    // Predicated region
    $region6: #{tpu_custom_call.1} parent=1 // pred_check
      _
    $region7: #{tpu_custom_call.1} parent=1 // pred_check_branch
      %24 = sbr.rel (0) target = $region9
    $region8: #{tpu_custom_call.1} parent=1 // pred_region
      _
    $region9: #{tpu_custom_call.1} parent=1 // pred_fallthru
      _
    // Predicated region
    $region10: #{tpu_custom_call.1} parent=1 // pred_check
      _
    $region11: #{tpu_custom_call.1} parent=1 // pred_check_branch
      %26 = sbr.rel (0) target = $region13
    $region12: #{tpu_custom_call.1} parent=1 // pred_region
      _
    $region13: #{tpu_custom_call.1} parent=1 // pred_fallthru
      _
    // Predicated region
    $region14: #{tpu_custom_call.1} parent=1 // pred_check
      _
    $region15: #{tpu_custom_call.1} parent=1 // pred_check_branch
      %28 = sbr.rel (0) target = $region17
    $region16: #{tpu_custom_call.1} parent=1 // pred_region
      _
    $region17: #{tpu_custom_call.1} parent=1 // pred_fallthru
      _
    // Predicated region
    $region18: #{tpu_custom_call.1} parent=1 // pred_check
      _
    $region19: #{tpu_custom_call.1} parent=1 // pred_check_branch
      %30 = sbr.rel (0) target = $region21
    $region20: #{tpu_custom_call.1} parent=1 // pred_region
      _
    $region21: #{tpu_custom_call.1} parent=1 // pred_fallthru
      _
    // Predicated region
    $region22: #{tpu_custom_call.1} parent=1 // pred_check
      _
    $region23: #{tpu_custom_call.1} parent=1 // pred_check_branch
      %32 = sbr.rel (0) target = $region25
    $region24: #{tpu_custom_call.1} parent=1 // pred_region
      _
    $region25: #{tpu_custom_call.1} parent=1 // pred_fallthru
      _
    // Predicated region
    $region26: #{tpu_custom_call.1} parent=1 // pred_check
      _
    $region27: #{tpu_custom_call.1} parent=1 // pred_check_branch
      %34 = sbr.rel (0) target = $region29
    $region28: #{tpu_custom_call.1} parent=1 // pred_region
      _
    $region29: #{tpu_custom_call.1} parent=1 // pred_fallthru
      _
    // Predicated region
    $region30: #{tpu_custom_call.1} parent=1 // pred_check
      _
    $region31: #{tpu_custom_call.1} parent=1 // pred_check_branch
      %36 = sbr.rel (0) target = $region33
    $region32: #{tpu_custom_call.1} parent=1 // pred_region
      _
    $region33: #{tpu_custom_call.1} parent=1 // pred_fallthru
      _
    // Predicated region
    $region34: #{tpu_custom_call.1} parent=1 // pred_check
      _
    $region35: #{tpu_custom_call.1} parent=1 // pred_check_branch
      %38 = sbr.rel (0) target = $region37
    $region36: #{tpu_custom_call.1} parent=1 // pred_region
      _
    $region37: #{tpu_custom_call.1} parent=1 // pred_fallthru
      _
    // Predicated region
    $region38: #{tpu_custom_call.1} parent=1 // pred_check
      _
    $region39: #{tpu_custom_call.1} parent=1 // pred_check_branch
      %40 = sbr.rel (0) target = $region41
    $region40: #{tpu_custom_call.1} parent=1 // pred_region
      _
    $region41: #{tpu_custom_call.1} parent=1 // pred_fallthru
      _
    %v41 = vld [vmem:[%s1] sm:$0xff]
    %v42 = vld [vmem:[%s1 + $0x8] sm:$0xff]
    %v43 = vld [vmem:[%s1 + $0x10] sm:$0xff]
    %v44 = vld [vmem:[%s1 + $0x18] sm:$0xff]
    %v45 = vld [vmem:[%s1 + $0x20] sm:$0xff]
    %v46 = vld [vmem:[%s1 + $0x28] sm:$0xff]
    %v47 = vld [vmem:[%s1 + $0x30] sm:$0xff]
    %v48 = vld [vmem:[%s1 + $0x38] sm:$0xff]
    %v49 = vld [vmem:[%s0] sm:$0xff]
    %v50 = vld [vmem:[%s0 + $0x8] sm:$0xff]
    %v51 = vld [vmem:[%s0 + $0x10] sm:$0xff]
    %v52 = vld [vmem:[%s0 + $0x18] sm:$0xff]
    %v53 = vld [vmem:[%s2] sm:$0xff]
    %v54 = vld [vmem:[%s2 + $0x8] sm:$0xff]
    %vm55 = vcmask 130048
    %v57 = vsel %vm55, %v53, 0
    %v60 = vsel %vm55, %v54, 0
    %62 = vmatpush.msra.mxu0 0.0
    %63 = vmatpush.msra.mxu0 0.0
    %64 = vmatpush.msra.mxu0 0.0
    %65 = vmatpush.msra.mxu0 0.0
    %66 = vmatpush.msra.mxu0 0.0
    %67 = vmatpush.msra.mxu0 0.0
    %68 = vmatpush.msra.mxu0 0.0
    %69 = vmatpush.msra.mxu0 0.0
    %70 = vmatpush.msra.mxu0 0.0
    %71 = vmatpush.msra.mxu0 0.0
    %72 = vmatpush.msra.mxu0 0.0
    %73 = vmatpush.msra.mxu0 0.0
    %74 = vmatpush.msra.mxu0 0.0
    %75 = vmatpush.msra.mxu0 0.0
    %76 = vmatpush.msra.mxu0 %v51
    %77 = vmatpush.msra.mxu0 %v49
    %78 = vmatmul.f32.gmra.mxu0 %v57
    %v79 = vpop.f32.mrf.mxu0
    %v80 = vadd.f32 0.0, %v79
    %81 = vmatmul.f32.gmra.mxu0 %v60
    %v82 = vpop.f32.mrf.mxu0
    %v83 = vadd.f32 0.0, %v82
    %84 = vdwg.mxu0
    %85 = vmatpush.msra.mxu0 0.0
    %86 = vmatpush.msra.mxu0 0.0
    %87 = vmatpush.msra.mxu0 0.0
    %88 = vmatpush.msra.mxu0 0.0
    %89 = vmatpush.msra.mxu0 0.0
    %90 = vmatpush.msra.mxu0 0.0
    %91 = vmatpush.msra.mxu0 0.0
    %92 = vmatpush.msra.mxu0 0.0
    %93 = vmatpush.msra.mxu0 0.0
    %94 = vmatpush.msra.mxu0 0.0
    %95 = vmatpush.msra.mxu0 0.0
    %96 = vmatpush.msra.mxu0 0.0
    %97 = vmatpush.msra.mxu0 0.0
    %98 = vmatpush.msra.mxu0 0.0
    %99 = vmatpush.msra.mxu0 %v52
    %100 = vmatpush.msra.mxu0 %v50
    %101 = vmatmul.f32.gmra.mxu0 %v57
    %v102 = vpop.f32.mrf.mxu0
    %v103 = vadd.f32 0.0, %v102
    %104 = vmatmul.f32.gmra.mxu0 %v60
    %v105 = vpop.f32.mrf.mxu0
    %v106 = vadd.f32 0.0, %v105
    %107 = vdwg.mxu0
    %s108 = scalar_lea.vmem %s2, 16
    %v109 = vld [vmem:[%s108] sm:$0xff]
    %v110 = vld [vmem:[%s108 + $0x8] sm:$0xff]
    %v112 = vsel %vm55, %v109, 0
    %v115 = vsel %vm55, %v110, 0
    %117 = vmatpush.msra.mxu0 0.0
    %118 = vmatpush.msra.mxu0 0.0
    %119 = vmatpush.msra.mxu0 0.0
    %120 = vmatpush.msra.mxu0 0.0
    %121 = vmatpush.msra.mxu0 0.0
    %122 = vmatpush.msra.mxu0 0.0
    %123 = vmatpush.msra.mxu0 0.0
    %124 = vmatpush.msra.mxu0 0.0
    %125 = vmatpush.msra.mxu0 0.0
    %126 = vmatpush.msra.mxu0 0.0
    %127 = vmatpush.msra.mxu0 0.0
    %128 = vmatpush.msra.mxu0 0.0
    %129 = vmatpush.msra.mxu0 0.0
    %130 = vmatpush.msra.mxu0 0.0
    %131 = vmatpush.msra.mxu0 %v51
    %132 = vmatpush.msra.mxu0 %v49
    %133 = vmatmul.f32.gmra.mxu0 %v112
    %v134 = vpop.f32.mrf.mxu0
    %v135 = vadd.f32 0.0, %v134
    %136 = vmatmul.f32.gmra.mxu0 %v115
    %v137 = vpop.f32.mrf.mxu0
    %v138 = vadd.f32 0.0, %v137
    %139 = vdwg.mxu0
    %140 = vmatpush.msra.mxu0 0.0
    %141 = vmatpush.msra.mxu0 0.0
    %142 = vmatpush.msra.mxu0 0.0
    %143 = vmatpush.msra.mxu0 0.0
    %144 = vmatpush.msra.mxu0 0.0
    %145 = vmatpush.msra.mxu0 0.0
    %146 = vmatpush.msra.mxu0 0.0
    %147 = vmatpush.msra.mxu0 0.0
    %148 = vmatpush.msra.mxu0 0.0
    %149 = vmatpush.msra.mxu0 0.0
    %150 = vmatpush.msra.mxu0 0.0
    %151 = vmatpush.msra.mxu0 0.0
    %152 = vmatpush.msra.mxu0 0.0
    %153 = vmatpush.msra.mxu0 0.0
    %154 = vmatpush.msra.mxu0 %v52
    %155 = vmatpush.msra.mxu0 %v50
    %156 = vmatmul.f32.gmra.mxu0 %v112
    %v157 = vpop.f32.mrf.mxu0
    %v158 = vadd.f32 0.0, %v157
    %159 = vmatmul.f32.gmra.mxu0 %v115
    %v160 = vpop.f32.mrf.mxu0
    %v161 = vadd.f32 0.0, %v160
    %162 = vdwg.mxu0
    %165 = vrot.lane.b32.xlu0 %v135, 36
    %v166 = vpop.permute.xlu0 %165
    %167 = vrot.lane.b32.xlu0 %v138, 36
    %v168 = vpop.permute.xlu0 %167
    %vm171 = vcmask 293888
    %v172 = vsel %vm171, %v80, %v166
    %v173 = vsel %vm171, %v83, %v168
    %176 = vrot.lane.b32.xlu0 %v80, 92
    %v177 = vpop.permute.xlu0 %176
    %178 = vrot.lane.b32.xlu0 %v83, 92
    %v179 = vpop.permute.xlu0 %178
    %v182 = vsel %vm171, %v177, %v135
    %v183 = vsel %vm171, %v179, %v138
    %184 = vrot.lane.b32.xlu0 %v80, 56
    %v185 = vpop.permute.xlu0 %184
    %186 = vrot.lane.b32.xlu0 %v83, 56
    %v187 = vpop.permute.xlu0 %186
    %190 = vrot.lane.b32.xlu0 %v135, 92
    %v191 = vpop.permute.xlu0 %190
    %192 = vrot.lane.b32.xlu0 %v138, 92
    %v193 = vpop.permute.xlu0 %192
    %v196 = vsel %vm171, %v185, %v191
    %v197 = vsel %vm171, %v187, %v193
    %200 = vrot.lane.b32.xlu0 %v80, 20
    %v201 = vpop.permute.xlu0 %200
    %202 = vrot.lane.b32.xlu0 %v103, 20
    %v203 = vpop.permute.xlu0 %202
    %204 = vrot.lane.b32.xlu0 %v83, 20
    %v205 = vpop.permute.xlu0 %204
    %206 = vrot.lane.b32.xlu0 %v106, 20
    %v207 = vpop.permute.xlu0 %206
    %vm208 = vcmask 162816
    %v209 = vsel %vm208, %v201, %v203
    %v210 = vsel %vm208, %v205, %v207
    %215 = vrot.lane.b32.xlu0 %v135, 56
    %v216 = vpop.permute.xlu0 %215
    %217 = vrot.lane.b32.xlu0 %v158, 56
    %v218 = vpop.permute.xlu0 %217
    %219 = vrot.lane.b32.xlu0 %v138, 56
    %v220 = vpop.permute.xlu0 %219
    %221 = vrot.lane.b32.xlu0 %v161, 56
    %v222 = vpop.permute.xlu0 %221
    %vm223 = vcmask 457728
    %v224 = vsel %vm223, %v216, %v218
    %v225 = vsel %vm223, %v220, %v222
    %v228 = vsel %vm171, %v209, %v224
    %v229 = vsel %vm171, %v210, %v225
    %v230 = vld [vmem:[%s3] sm:$0xff]
    %v231 = vld [vmem:[%s3 + $0x8] sm:$0xff]
    %v232 = vld [vmem:[%s3 + $0x10] sm:$0xff]
    %v233 = vld [vmem:[%s3 + $0x18] sm:$0xff]
    %v234 = vld [vmem:[%s3 + $0x20] sm:$0xff]
    %v235 = vld [vmem:[%s3 + $0x28] sm:$0xff]
    %v236 = vld [vmem:[%s3 + $0x30] sm:$0xff]
    %v237 = vld [vmem:[%s3 + $0x38] sm:$0xff]
    %v238 = vld [vmem:[%s3 + $0x40] sm:$0xff]
    %v239 = vld [vmem:[%s5] sm:$0xff]
    %v240 = vld [vmem:[%s5 + $0x8] sm:$0xff]
    %v241 = vld [vmem:[%s5 + $0x10] sm:$0xff]
    %v242 = vld [vmem:[%s5 + $0x18] sm:$0xff]
    %vm243 = vcmask 261120
    %v245 = vsel %vm243, %v41, 0
    %v248 = vsel %vm243, %v42, 0
    %v251 = vsel %vm243, %v43, 0
    %v254 = vsel %vm243, %v44, 0
    %v257 = vsel %vm243, %v45, 0
    %v260 = vsel %vm243, %v46, 0
    %v263 = vsel %vm243, %v47, 0
    %v266 = vsel %vm243, %v48, 0
    %268 = vmatpush.msra.mxu0 0.0
    %269 = vmatpush.msra.mxu0 0.0
    %270 = vmatpush.msra.mxu0 0.0
    %271 = vmatpush.msra.mxu0 0.0
    %272 = vmatpush.msra.mxu0 0.0
    %273 = vmatpush.msra.mxu0 0.0
    %274 = vmatpush.msra.mxu0 0.0
    %275 = vmatpush.msra.mxu0 0.0
    %276 = vmatpush.msra.mxu0 0.0
    %277 = vmatpush.msra.mxu0 0.0
    %278 = vmatpush.msra.mxu0 0.0
    %279 = vmatpush.msra.mxu0 0.0
    %280 = vmatpush.msra.mxu0 %v242
    %281 = vmatpush.msra.mxu0 %v241
    %282 = vmatpush.msra.mxu0 %v240
    %283 = vmatpush.msra.mxu0 %v239
    %284 = vmatmul.f32.gmra.mxu0 %v245
    %v285 = vpop.f32.mrf.mxu0
    %v286 = vadd.f32 0.0, %v285
    %287 = vmatmul.f32.gmra.mxu0 %v248
    %v288 = vpop.f32.mrf.mxu0
    %v289 = vadd.f32 0.0, %v288
    %290 = vmatmul.f32.gmra.mxu0 %v251
    %v291 = vpop.f32.mrf.mxu0
    %v292 = vadd.f32 0.0, %v291
    %293 = vmatmul.f32.gmra.mxu0 %v254
    %v294 = vpop.f32.mrf.mxu0
    %v295 = vadd.f32 0.0, %v294
    %296 = vmatmul.f32.gmra.mxu0 %v257
    %v297 = vpop.f32.mrf.mxu0
    %v298 = vadd.f32 0.0, %v297
    %299 = vmatmul.f32.gmra.mxu0 %v260
    %v300 = vpop.f32.mrf.mxu0
    %v301 = vadd.f32 0.0, %v300
    %302 = vmatmul.f32.gmra.mxu0 %v263
    %v303 = vpop.f32.mrf.mxu0
    %v304 = vadd.f32 0.0, %v303
    %305 = vmatmul.f32.gmra.mxu0 %v266
    %v306 = vpop.f32.mrf.mxu0
    %v307 = vadd.f32 0.0, %v306
    %308 = vdwg.mxu0
    %vm309 = vcmask 588800
    %v311 = vsel %vm309, %v172, 0
    %v314 = vsel %vm309, %v173, 0
    %v317 = vsel %vm309, %v182, 0
    %v320 = vsel %vm309, %v183, 0
    %v323 = vsel %vm309, %v196, 0
    %v326 = vsel %vm309, %v197, 0
    %v329 = vsel %vm309, %v228, 0
    %v332 = vsel %vm309, %v229, 0
    %334 = vmatpush.msra.mxu0 0.0
    %335 = vmatpush.msra.mxu0 0.0
    %336 = vmatpush.msra.mxu0 0.0
    %337 = vmatpush.msra.mxu0 0.0
    %338 = vmatpush.msra.mxu0 0.0
    %339 = vmatpush.msra.mxu0 0.0
    %340 = vmatpush.msra.mxu0 0.0
    %341 = vmatpush.msra.mxu0 %v238
    %342 = vmatpush.msra.mxu0 %v237
    %343 = vmatpush.msra.mxu0 %v236
    %344 = vmatpush.msra.mxu0 %v235
    %345 = vmatpush.msra.mxu0 %v234
    %346 = vmatpush.msra.mxu0 %v233
    %347 = vmatpush.msra.mxu0 %v232
    %348 = vmatpush.msra.mxu0 %v231
    %349 = vmatpush.msra.mxu0 %v230
    %350 = vmatmul.f32.gmra.mxu0 %v311
    %v351 = vpop.f32.mrf.mxu0
    %v352 = vadd.f32 %v286, %v351
    %353 = vmatmul.f32.gmra.mxu0 %v314
    %v354 = vpop.f32.mrf.mxu0
    %v355 = vadd.f32 %v289, %v354
    %356 = vmatmul.f32.gmra.mxu0 %v317
    %v357 = vpop.f32.mrf.mxu0
    %v358 = vadd.f32 %v292, %v357
    %359 = vmatmul.f32.gmra.mxu0 %v320
    %v360 = vpop.f32.mrf.mxu0
    %v361 = vadd.f32 %v295, %v360
    %362 = vmatmul.f32.gmra.mxu0 %v323
    %v363 = vpop.f32.mrf.mxu0
    %v364 = vadd.f32 %v298, %v363
    %365 = vmatmul.f32.gmra.mxu0 %v326
    %v366 = vpop.f32.mrf.mxu0
    %v367 = vadd.f32 %v301, %v366
    %368 = vmatmul.f32.gmra.mxu0 %v329
    %v369 = vpop.f32.mrf.mxu0
    %v370 = vadd.f32 %v304, %v369
    %371 = vmatmul.f32.gmra.mxu0 %v332
    %v372 = vpop.f32.mrf.mxu0
    %v373 = vadd.f32 %v307, %v372
    %374 = vdwg.mxu0
    %v375 = vld [vmem:[%s4] sm:$0xff]
    %v376 = vld [vmem:[%s4 + $0x8] sm:$0xff]
    %v377 = vadd.f32 %v352, %v375
    %v378 = vadd.f32 %v355, %v376
    %v379 = vadd.f32 %v358, %v375
    %v380 = vadd.f32 %v361, %v376
    %v381 = vadd.f32 %v364, %v375
    %v382 = vadd.f32 %v367, %v376
    %v383 = vadd.f32 %v370, %v375
    %v384 = vadd.f32 %v373, %v376
    %s385 = sld [smem:[#allocation2]]
    %vm386 = vcmp.gt.f32.partialorder %v377, 0.0
    %vm387 = vcmp.gt.f32.partialorder %v378, 0.0
    %vm388 = vcmp.gt.f32.partialorder %v379, 0.0
    %vm389 = vcmp.gt.f32.partialorder %v380, 0.0
    %vm390 = vcmp.gt.f32.partialorder %v381, 0.0
    %vm391 = vcmp.gt.f32.partialorder %v382, 0.0
    %vm392 = vcmp.gt.f32.partialorder %v383, 0.0
    %vm393 = vcmp.gt.f32.partialorder %v384, 0.0
    %v394 = vstv %s385
    %v395 = vmul.f32 %v394, %v377
    %v396 = vmul.f32 %v394, %v378
    %v397 = vmul.f32 %v394, %v379
    %v398 = vmul.f32 %v394, %v380
    %v399 = vmul.f32 %v394, %v381
    %v400 = vmul.f32 %v394, %v382
    %v401 = vmul.f32 %v394, %v383
    %v402 = vmul.f32 %v394, %v384
    %v403 = vsel %vm386, %v377, %v395
    %v404 = vsel %vm387, %v378, %v396
    %v405 = vsel %vm388, %v379, %v397
    %v406 = vsel %vm389, %v380, %v398
    %v407 = vsel %vm390, %v381, %v399
    %v408 = vsel %vm391, %v382, %v400
    %v409 = vsel %vm392, %v383, %v401
    %v410 = vsel %vm393, %v384, %v402
    %v411 = vld [vmem:[%s7] sm:$0xff]
    %v412 = vld [vmem:[%s7 + $0x8] sm:$0xff]
    %v413 = vld [vmem:[%s7 + $0x10] sm:$0xff]
    %v414 = vld [vmem:[%s7 + $0x18] sm:$0xff]
    %v415 = vld [vmem:[%s8] sm:$0xff]
    %v416 = vld [vmem:[%s8 + $0x8] sm:$0xff]
    %v417 = vld [vmem:[%s8 + $0x10] sm:$0xff]
    %v418 = vld [vmem:[%s8 + $0x18] sm:$0xff]
    %419 = vmatpush.msra.mxu0 0.0
    %420 = vmatpush.msra.mxu0 0.0
    %421 = vmatpush.msra.mxu0 0.0
    %422 = vmatpush.msra.mxu0 0.0
    %423 = vmatpush.msra.mxu0 0.0
    %424 = vmatpush.msra.mxu0 0.0
    %425 = vmatpush.msra.mxu0 0.0
    %426 = vmatpush.msra.mxu0 0.0
    %427 = vmatpush.msra.mxu0 0.0
    %428 = vmatpush.msra.mxu0 0.0
    %429 = vmatpush.msra.mxu0 0.0
    %430 = vmatpush.msra.mxu0 0.0
    %431 = vmatpush.msra.mxu0 %v418
    %432 = vmatpush.msra.mxu0 %v417
    %433 = vmatpush.msra.mxu0 %v416
    %434 = vmatpush.msra.mxu0 %v415
    %435 = vmatmul.f32.gmra.mxu0 %v245
    %v436 = vpop.f32.mrf.mxu0
    %v437 = vadd.f32 0.0, %v436
    %438 = vmatmul.f32.gmra.mxu0 %v248
    %v439 = vpop.f32.mrf.mxu0
    %v440 = vadd.f32 0.0, %v439
    %441 = vmatmul.f32.gmra.mxu0 %v251
    %v442 = vpop.f32.mrf.mxu0
    %v443 = vadd.f32 0.0, %v442
    %444 = vmatmul.f32.gmra.mxu0 %v254
    %v445 = vpop.f32.mrf.mxu0
    %v446 = vadd.f32 0.0, %v445
    %447 = vmatmul.f32.gmra.mxu0 %v257
    %v448 = vpop.f32.mrf.mxu0
    %v449 = vadd.f32 0.0, %v448
    %450 = vmatmul.f32.gmra.mxu0 %v260
    %v451 = vpop.f32.mrf.mxu0
    %v452 = vadd.f32 0.0, %v451
    %453 = vmatmul.f32.gmra.mxu0 %v263
    %v454 = vpop.f32.mrf.mxu0
    %v455 = vadd.f32 0.0, %v454
    %456 = vmatmul.f32.gmra.mxu0 %v266
    %v457 = vpop.f32.mrf.mxu0
    %v458 = vadd.f32 0.0, %v457
    %459 = vdwg.mxu0
    %v461 = vsel %vm243, %v403, 0
    %v464 = vsel %vm243, %v404, 0
    %v467 = vsel %vm243, %v405, 0
    %v470 = vsel %vm243, %v406, 0
    %v473 = vsel %vm243, %v407, 0
    %v476 = vsel %vm243, %v408, 0
    %v479 = vsel %vm243, %v409, 0
    %v482 = vsel %vm243, %v410, 0
    %484 = vmatpush.msra.mxu0 0.0
    %485 = vmatpush.msra.mxu0 0.0
    %486 = vmatpush.msra.mxu0 0.0
    %487 = vmatpush.msra.mxu0 0.0
    %488 = vmatpush.msra.mxu0 0.0
    %489 = vmatpush.msra.mxu0 0.0
    %490 = vmatpush.msra.mxu0 0.0
    %491 = vmatpush.msra.mxu0 0.0
    %492 = vmatpush.msra.mxu0 0.0
    %493 = vmatpush.msra.mxu0 0.0
    %494 = vmatpush.msra.mxu0 0.0
    %495 = vmatpush.msra.mxu0 0.0
    %496 = vmatpush.msra.mxu0 %v414
    %497 = vmatpush.msra.mxu0 %v413
    %498 = vmatpush.msra.mxu0 %v412
    %499 = vmatpush.msra.mxu0 %v411
    %500 = vmatmul.f32.gmra.mxu0 %v461
    %v501 = vpop.f32.mrf.mxu0
    %v502 = vadd.f32 %v437, %v501
    %503 = vmatmul.f32.gmra.mxu0 %v464
    %v504 = vpop.f32.mrf.mxu0
    %v505 = vadd.f32 %v440, %v504
    %506 = vmatmul.f32.gmra.mxu0 %v467
    %v507 = vpop.f32.mrf.mxu0
    %v508 = vadd.f32 %v443, %v507
    %509 = vmatmul.f32.gmra.mxu0 %v470
    %v510 = vpop.f32.mrf.mxu0
    %v511 = vadd.f32 %v446, %v510
    %512 = vmatmul.f32.gmra.mxu0 %v473
    %v513 = vpop.f32.mrf.mxu0
    %v514 = vadd.f32 %v449, %v513
    %515 = vmatmul.f32.gmra.mxu0 %v476
    %v516 = vpop.f32.mrf.mxu0
    %v517 = vadd.f32 %v452, %v516
    %518 = vmatmul.f32.gmra.mxu0 %v479
    %v519 = vpop.f32.mrf.mxu0
    %v520 = vadd.f32 %v455, %v519
    %521 = vmatmul.f32.gmra.mxu0 %v482
    %v522 = vpop.f32.mrf.mxu0
    %v523 = vadd.f32 %v458, %v522
    %524 = vdwg.mxu0
    %v525 = vld [vmem:[#allocation3] sm:$0x1]
    %v527 = vperm.slane %v525, 0
    %v529 = vadd.f32 %v502, %v527
    %v530 = vadd.f32 %v505, %v527
    %v531 = vadd.f32 %v508, %v527
    %v532 = vadd.f32 %v511, %v527
    %v533 = vadd.f32 %v514, %v527
    %v534 = vadd.f32 %v517, %v527
    %v535 = vadd.f32 %v520, %v527
    %v536 = vadd.f32 %v523, %v527
    %537 = vst.msk [vmem:[#allocation4] sm:$0xff] %vm243, %v403
    %538 = vst.msk [vmem:[#allocation4 + $0x8] sm:$0xff] %vm243, %v404
    %539 = vst.msk [vmem:[#allocation4 + $0x10] sm:$0xff] %vm243, %v405
    %540 = vst.msk [vmem:[#allocation4 + $0x18] sm:$0xff] %vm243, %v406
    %541 = vst.msk [vmem:[#allocation4 + $0x20] sm:$0xff] %vm243, %v407
    %542 = vst.msk [vmem:[#allocation4 + $0x28] sm:$0xff] %vm243, %v408
    %543 = vst.msk [vmem:[#allocation4 + $0x30] sm:$0xff] %vm243, %v409
    %544 = vst.msk [vmem:[#allocation4 + $0x38] sm:$0xff] %vm243, %v410
    %vm545 = vcmask 7168
    %546 = vst.msk [vmem:[%s10] sm:$0xff] %vm545, %v529
    %547 = vst.msk [vmem:[%s10 + $0x8] sm:$0xff] %vm545, %v530
    %548 = vst.msk [vmem:[%s10 + $0x10] sm:$0xff] %vm545, %v531
    %549 = vst.msk [vmem:[%s10 + $0x18] sm:$0xff] %vm545, %v532
    %550 = vst.msk [vmem:[%s10 + $0x20] sm:$0xff] %vm545, %v533
    %551 = vst.msk [vmem:[%s10 + $0x28] sm:$0xff] %vm545, %v534
    %552 = vst.msk [vmem:[%s10 + $0x30] sm:$0xff] %vm545, %v535
    %553 = vst.msk [vmem:[%s10 + $0x38] sm:$0xff] %vm545, %v536
    // Predicated region
    $region42: #{tpu_custom_call.1} parent=1 // pred_check
      _
    $region43: #{tpu_custom_call.1} parent=1 // pred_check_branch
      %555 = sbr.rel (0) target = $region45
    $region44: #{tpu_custom_call.1} parent=1 // pred_region
      _
    $region45: #{tpu_custom_call.1} parent=1 // pred_fallthru
      _
    // Predicated region
    $region46: #{tpu_custom_call.1} parent=1 // pred_check
      _
    $region47: #{tpu_custom_call.1} parent=1 // pred_check_branch
      %557 = sbr.rel (0) target = $region49
    $region48: #{tpu_custom_call.1} parent=1 // pred_region
      %559 = vsyncadd [#allocation5], 0
      %s560 = sshll.u32 [#allocation4], 4
      %s561 = int_to_ptr.vmem [resolvable:$true] %s560
      %s562 = sshll.u32 %s11, 4
      %s563 = int_to_ptr.hbm [resolvable:$true] %s562
      %568 = dma.vmem_to_hbm [thread:$0]  %s561, 1024, %s563, [#allocation5], 128, 128, 8
    $region49: #{tpu_custom_call.1} parent=1 // pred_fallthru
      _
    // Predicated region
    $region50: #{tpu_custom_call.1} parent=1 // pred_check
      _
    $region51: #{tpu_custom_call.1} parent=1 // pred_check_branch
      %570 = sbr.rel (0) target = $region53
    $region52: #{tpu_custom_call.1} parent=1 // pred_region
      _
    $region53: #{tpu_custom_call.1} parent=1 // pred_fallthru
      _
    // Predicated region
    $region54: #{tpu_custom_call.1} parent=1 // pred_check
      _
    $region55: #{tpu_custom_call.1} parent=1 // pred_check_branch
      %572 = sbr.rel (0) target = $region57
    $region56: #{tpu_custom_call.1} parent=1 // pred_region
      %574 = dma.done [#allocation5], 1024
    $region57: #{tpu_custom_call.1} parent=1 // pred_fallthru
      _
    %575 = vsyncpa [#allocation5], 1

</llo_original>
